<compile_context>
chip_gen: v5e
topology: v5e:2x2
jax: 0.10.0
libtpu: 0.0.40
codegen_flags: <defaults>
</compile_context>

<pallas_src>
import functools

import jax
import jax.numpy as jnp
from jax.experimental import pallas as pl
from jax.experimental.pallas import tpu as pltpu


# ----------------------------- helpers ------------------------------------- #

_LANE = 128
_BF16_SUBLANE = 16  # bf16 vregs pack 16 sublanes


def _round_up(x, m):
    return ((x + m - 1) // m) * m


def _vmem_capacity_bytes():
    try:
        return int(pltpu.get_tpu_info().vmem_capacity_bytes)
    except Exception:
        # Conservative fallback = v7x per-TensorCore VMEM.
        return 64 * 1024 * 1024


def _gelu_new(x):
    # "gelu_new" as used by HF / compacter Activations(); kept in f32
    # (v5e VPU/EUP have no bf16 path).
    c = 0.7978845608028654  # sqrt(2/pi)
    return 0.5 * x * (1.0 + jnp.tanh(c * (x + 0.044715 * x * x * x)))


# ----------------------------- Pallas kernel ------------------------------- #

def adapter_kernel(x_ref, wd_ref, bd_ref, wu_ref, bu_ref, o_ref, *, fuse_residual):
    # x_ref : (TILE_N, D_k) native dtype    wd_ref : (D_k, d_k) bf16
    # bd_ref: (1, d_k)      f32             wu_ref : (d_k, D_k) bf16
    # bu_ref: (1, D_k)      f32             o_ref  : (TILE_N, D_k) out dtype
    x = x_ref[...]
    xb = x.astype(jnp.bfloat16)  # cast in-kernel: saves a full HBM pass over x
    z = jnp.dot(xb, wd_ref[...], preferred_element_type=jnp.float32) + bd_ref[...]
    z = _gelu_new(z)                                   # f32 elementwise (EUP tanh)
    out = jnp.dot(z.astype(jnp.bfloat16), wu_ref[...],
                  preferred_element_type=jnp.float32) + bu_ref[...]
    if fuse_residual:
        out = out + x.astype(jnp.float32)              # optional fused x + adapter(x)
    o_ref[...] = out.astype(o_ref.dtype)


def hypercomplex_adapter(x, w_down, b_down, w_up, b_up, *,
                         add_residual=False, out_dtype=None):
    """x: (B, S, D); effective (Kronecker-summed) weights already materialized."""
    B, S, D = x.shape
    d = w_down.shape[1]
    N = B * S
    out_dtype = x.dtype if out_dtype is None else out_dtype
    x_itemsize = jnp.dtype(x.dtype).itemsize
    out_itemsize = jnp.dtype(out_dtype).itemsize

    # --- lane-dense feature dims (no-op when already multiples of 128) ------ #
    D_k = D if D % _LANE == 0 else _round_up(D, _LANE)
    d_k = d if d % _LANE == 0 else _round_up(d, _LANE)

    # --- pick TILE_N from the VMEM budget ----------------------------------- #
    vmem_cap = _vmem_capacity_bytes()
    big_vmem = vmem_cap >= 100 * 1024 * 1024           # 128 MiB parts (v5e/v6e)
    budget = int(vmem_cap * (0.60 if big_vmem else 0.45))
    tile_cap = 2048 if big_vmem else 1024

    # resident params: single VMEM buffer (constant index_map + Buffered(1))
    weight_bytes = 2 * (D_k * d_k + d_k * D_k) + 4 * (d_k + D_k)
    per_row = (
        2 * x_itemsize * D_k          # x tile, double-buffered, native dtype
        + 2 * out_itemsize * D_k      # out tile, double-buffered
        + 2 * D_k                     # bf16 copy of x tile
        + 4 * d_k + 2 * d_k           # z (f32) + bf16 copy
        + 4 * D_k                     # f32 out before cast
    )
    tile_n = max(_BF16_SUBLANE, (budget - weight_bytes) // max(per_row, 1))
    tile_n = min(tile_n, tile_cap)
    if N >= 2 * _BF16_SUBLANE:
        # guarantee >= 2 grid steps so both v7x TensorCores get work
        tile_n = min(tile_n, _round_up(pl.cdiv(N, 2), _BF16_SUBLANE))
    tile_n = min(tile_n, _round_up(N, _BF16_SUBLANE))
    tile_n = max(_BF16_SUBLANE, (tile_n // _BF16_SUBLANE) * _BF16_SUBLANE)

    grid = (pl.cdiv(N, tile_n),)      # ragged last block: Pallas masks its writes

    # --- inputs / params ----------------------------------------------------- #
    x2d = x.reshape(N, D)
    if D_k == D:
        x_in = x2d                    # fast path: no pad / no cast pass over x
    else:
        x_in = jnp.pad(x2d, ((0, 0), (0, D_k - D)))   # keep native dtype

    wd_p = jnp.pad(w_down, ((0, D_k - D), (0, d_k - d))).astype(jnp.bfloat16)
    bd_p = jnp.pad(b_down, (0, d_k - d)).reshape(1, d_k).astype(jnp.float32)
    wu_p = jnp.pad(w_up, ((0, d_k - d), (0, D_k - D))).astype(jnp.bfloat16)
    bu_p = jnp.pad(b_up, (0, D_k - D)).reshape(1, D_k).astype(jnp.float32)

    cost = pl.CostEstimate(
        flops=4 * N * D_k * d_k,                        # two matmuls
        transcendentals=N * d_k,                        # tanh in gelu_new
        bytes_accessed=(x_in.size * x_itemsize + N * D_k * out_itemsize
                        + wd_p.size * 2 + wu_p.size * 2
                        + bd_p.size * 4 + bu_p.size * 4),
    )

    vmem_need = weight_bytes + tile_n * per_row + (4 << 20)
    vmem_limit = int(min(vmem_cap, max(vmem_need, 16 << 20)))

    kernel = functools.partial(adapter_kernel, fuse_residual=add_residual)

    def _call(resident_mode):
        kw = {} if resident_mode is None else {"pipeline_mode": resident_mode}
        return pl.pallas_call(
            kernel,
            out_shape=jax.ShapeDtypeStruct((N, D_k), out_dtype),
            grid=grid,
            in_specs=[
                pl.BlockSpec((tile_n, D_k), lambda i: (i, 0)),       # x tile (pipelined)
                pl.BlockSpec((D_k, d_k), lambda i: (0, 0), **kw),    # resident weights
                pl.BlockSpec((1, d_k), lambda i: (0, 0), **kw),
                pl.BlockSpec((d_k, D_k), lambda i: (0, 0), **kw),
                pl.BlockSpec((1, D_k), lambda i: (0, 0), **kw),
            ],
            out_specs=pl.BlockSpec((tile_n, D_k), lambda i: (i, 0)),
            compiler_params=pltpu.CompilerParams(
                dimension_semantics=("parallel",),                   # megacore on v7x
                vmem_limit_bytes=vmem_limit,
            ),
            cost_estimate=cost,
        )(x_in, wd_p, bd_p, wu_p, bu_p)

    try:
        out2d = _call(pl.Buffered(1))     # single-buffer the resident params
    except Exception:
        out2d = _call(None)               # fallback: default double buffering

    if D_k != D:
        out2d = out2d[:, :D]
    return out2d.reshape(B, S, D)


# ----------------------- PHM parameter construction ------------------------ #

def make_phm_weight(phm_rule, W):
    """H = sum_n kron(phm_rule[n], W[n]).

    phm_rule: (n, n, n), W: (n, in/n, out/n) -> H: (in, out)
    kron(A,B)[i*a+k, j*b+l] = A[i,j] * B[k,l]
    """
    n, a, b = W.shape
    H = jnp.einsum('nij,nkl->ikjl', phm_rule, W)      # (n, a, n, b)
    return H.reshape(n * a, n * b)


def init_phm_linear(key, in_features, out_features, phm_dim, phm_init_range=0.01):
    k1, k2, k3 = jax.random.split(key, 3)
    phm_rule = phm_init_range * jax.random.normal(
        k1, (phm_dim, phm_dim, phm_dim), dtype=jnp.float32)
    a, b = in_features // phm_dim, out_features // phm_dim
    scale = (2.0 / (a + b)) ** 0.5
    W = scale * jax.random.normal(k2, (phm_dim, a, b), dtype=jnp.float32)
    bias = 0.01 * jax.random.normal(k3, (out_features,), dtype=jnp.float32)
    H = make_phm_weight(phm_rule, W)                  # (in_features, out_features)
    return H, bias


# ---------------------------------- main ----------------------------------- #

if __name__ == "__main__":
    # config: input_dim=32, reduction_factor=4 -> down_sample_size=8,
    #         hypercomplex_division (phm_dim)=4, non_linearity="gelu_new"
    input_dim = 32
    reduction_factor = 4
    phm_dim = 4
    down_size = input_dim // reduction_factor

    B, S = 2, 8
    key = jax.random.PRNGKey(0)
    kx, kd, ku = jax.random.split(key, 3)

    x = jax.random.normal(kx, (B, S, input_dim), dtype=jnp.float32)

    w_down, b_down = init_phm_linear(kd, input_dim, down_size, phm_dim)
    w_up, b_up = init_phm_linear(ku, down_size, input_dim, phm_dim)

    out = hypercomplex_adapter(x, w_down, b_down, w_up, b_up)
    out = jax.block_until_ready(out)

    # pure-JAX f32 reference check (bf16 matmul operands => relaxed tolerance)
    def ref(x):
        z = x @ w_down + b_down
        c = 0.7978845608028654
        z = 0.5 * z * (1.0 + jnp.tanh(c * (z + 0.044715 * z ** 3)))
        return z @ w_up + b_up

    expected = ref(x)
    assert out.shape == expected.shape
    assert jnp.allclose(out, expected, atol=2e-2, rtol=2e-2), "mismatch vs reference"

    print("KERNEL_OK")
</pallas_src>

<mosaic_0001>
module attributes {stable_mosaic.version = 11 : i64} {
  func.func @adapter_kernel(%arg0: i32, %arg1: memref<16x128xf32, #tpu.memory_space<vmem>>, %arg2: memref<128x128xbf16, #tpu.memory_space<vmem>>, %arg3: memref<1x128xf32, #tpu.memory_space<vmem>>, %arg4: memref<128x128xbf16, #tpu.memory_space<vmem>>, %arg5: memref<1x128xf32, #tpu.memory_space<vmem>>, %arg6: memref<16x128xf32, #tpu.memory_space<vmem>>) attributes {dimension_semantics = [#tpu.dimension_semantics<parallel>], iteration_bounds = array<i64: 1>, scalar_prefetch = 0 : i64, scratch_operands = 0 : i64, tpu.core_type = #tpu.core_type<tc>, window_params = [{transform_indices = @transform_0, window_bounds = array<i64: 16, 128>}, {pipeline_mode = #tpu.pipeline_mode<synchronous>, transform_indices = @transform_1, window_bounds = array<i64: 128, 128>}, {pipeline_mode = #tpu.pipeline_mode<synchronous>, transform_indices = @transform_2, window_bounds = array<i64: 1, 128>}, {pipeline_mode = #tpu.pipeline_mode<synchronous>, transform_indices = @transform_3, window_bounds = array<i64: 128, 128>}, {pipeline_mode = #tpu.pipeline_mode<synchronous>, transform_indices = @transform_4, window_bounds = array<i64: 1, 128>}, {transform_indices = @transform_5, window_bounds = array<i64: 16, 128>}]} {
    %c0 = arith.constant 0 : index
    %c0_0 = arith.constant 0 : index
    %0 = vector.load %arg1[%c0, %c0_0] : memref<16x128xf32, #tpu.memory_space<vmem>>, vector<16x128xf32>
    %1 = arith.truncf %0 : vector<16x128xf32> to vector<16x128xbf16>
    %c0_1 = arith.constant 0 : index
    %c0_2 = arith.constant 0 : index
    %2 = vector.load %arg2[%c0_1, %c0_2] : memref<128x128xbf16, #tpu.memory_space<vmem>>, vector<128x128xbf16>
    %cst = arith.constant dense<0.000000e+00> : vector<16x128xf32>
    %3 = tpu.matmul %1, %2, %cst {dimension_numbers = #tpu.dot_dimension_numbers<[1], [0], [0], [1], [0, 0, 1, 1], [], []>} : vector<16x128xbf16>, vector<128x128xbf16>, vector<16x128xf32> -> vector<16x128xf32>
    %c0_3 = arith.constant 0 : index
    %c0_4 = arith.constant 0 : index
    %4 = vector.load %arg3[%c0_3, %c0_4] : memref<1x128xf32, #tpu.memory_space<vmem>>, vector<1x128xf32>
    %5 = vector.broadcast %4 : vector<1x128xf32> to vector<16x128xf32>
    %6 = arith.addf %3, %5 : vector<16x128xf32>
    %cst_5 = arith.constant 5.000000e-01 : f32
    %7 = vector.broadcast %cst_5 : f32 to vector<16x128xf32>
    %8 = arith.mulf %7, %6 : vector<16x128xf32>
    %cst_6 = arith.constant 4.471500e-02 : f32
    %9 = vector.broadcast %cst_6 : f32 to vector<16x128xf32>
    %10 = arith.mulf %9, %6 : vector<16x128xf32>
    %11 = arith.mulf %10, %6 : vector<16x128xf32>
    %12 = arith.mulf %11, %6 : vector<16x128xf32>
    %13 = arith.addf %6, %12 : vector<16x128xf32>
    %cst_7 = arith.constant 0.797884583 : f32
    %14 = vector.broadcast %cst_7 : f32 to vector<16x128xf32>
    %15 = arith.mulf %14, %13 : vector<16x128xf32>
    %16 = math.tanh %15 : vector<16x128xf32>
    %cst_8 = arith.constant 1.000000e+00 : f32
    %17 = vector.broadcast %cst_8 : f32 to vector<16x128xf32>
    %18 = arith.addf %17, %16 : vector<16x128xf32>
    %19 = arith.mulf %8, %18 : vector<16x128xf32>
    %20 = arith.truncf %19 : vector<16x128xf32> to vector<16x128xbf16>
    %c0_9 = arith.constant 0 : index
    %c0_10 = arith.constant 0 : index
    %21 = vector.load %arg4[%c0_9, %c0_10] : memref<128x128xbf16, #tpu.memory_space<vmem>>, vector<128x128xbf16>
    %cst_11 = arith.constant dense<0.000000e+00> : vector<16x128xf32>
    %22 = tpu.matmul %20, %21, %cst_11 {dimension_numbers = #tpu.dot_dimension_numbers<[1], [0], [0], [1], [0, 0, 1, 1], [], []>} : vector<16x128xbf16>, vector<128x128xbf16>, vector<16x128xf32> -> vector<16x128xf32>
    %c0_12 = arith.constant 0 : index
    %c0_13 = arith.constant 0 : index
    %23 = vector.load %arg5[%c0_12, %c0_13] : memref<1x128xf32, #tpu.memory_space<vmem>>, vector<1x128xf32>
    %24 = vector.broadcast %23 : vector<1x128xf32> to vector<16x128xf32>
    %25 = arith.addf %22, %24 : vector<16x128xf32>
    %c0_14 = arith.constant 0 : index
    %c0_15 = arith.constant 0 : index
    %26 = vector.load %arg6[%c0_14, %c0_15] : memref<16x128xf32, #tpu.memory_space<vmem>>, vector<16x128xf32>
    tpu.vector_store %arg6[%c0_14, %c0_15], %25 {strides = array<i32>} : memref<16x128xf32, #tpu.memory_space<vmem>>, vector<16x128xf32>,
    return
  }
  func.func @transform_0(%arg0: i32) -> (i32, i32) {
    %c0_i32 = arith.constant 0 : i32
    %c0_i32_0 = arith.constant 0 : i32
    return %arg0, %c0_i32 : i32, i32
  }
  func.func @transform_1(%arg0: i32) -> (i32, i32) {
    %c0_i32 = arith.constant 0 : i32
    %c0_i32_0 = arith.constant 0 : i32
    %c0_i32_1 = arith.constant 0 : i32
    return %c0_i32, %c0_i32_0 : i32, i32
  }
  func.func @transform_2(%arg0: i32) -> (i32, i32) {
    %c0_i32 = arith.constant 0 : i32
    %c0_i32_0 = arith.constant 0 : i32
    %c0_i32_1 = arith.constant 0 : i32
    return %c0_i32, %c0_i32_0 : i32, i32
  }
  func.func @transform_3(%arg0: i32) -> (i32, i32) {
    %c0_i32 = arith.constant 0 : i32
    %c0_i32_0 = arith.constant 0 : i32
    %c0_i32_1 = arith.constant 0 : i32
    return %c0_i32, %c0_i32_0 : i32, i32
  }
  func.func @transform_4(%arg0: i32) -> (i32, i32) {
    %c0_i32 = arith.constant 0 : i32
    %c0_i32_0 = arith.constant 0 : i32
    %c0_i32_1 = arith.constant 0 : i32
    return %c0_i32, %c0_i32_0 : i32, i32
  }
  func.func @transform_5(%arg0: i32) -> (i32, i32) {
    %c0_i32 = arith.constant 0 : i32
    %c0_i32_0 = arith.constant 0 : i32
    return %arg0, %c0_i32 : i32, i32
  }
}

module attributes {stable_mosaic.version = 11 : i64} {
  func.func @adapter_kernel(%arg0: i32, %arg1: memref<16x128xf32, #tpu.memory_space<vmem>>, %arg2: memref<128x128xbf16, #tpu.memory_space<vmem>>, %arg3: memref<1x128xf32, #tpu.memory_space<vmem>>, %arg4: memref<128x128xbf16, #tpu.memory_space<vmem>>, %arg5: memref<1x128xf32, #tpu.memory_space<vmem>>, %arg6: memref<16x128xf32, #tpu.memory_space<vmem>>) attributes {dimension_semantics = [#tpu.dimension_semantics<parallel>], iteration_bounds = array<i64: 1>, scalar_prefetch = 0 : i64, scratch_operands = 0 : i64, tpu.core_type = #tpu.core_type<tc>, window_params = [{transform_indices = @transform_0, window_bounds = array<i64: 16, 128>}, {pipeline_mode = #tpu.pipeline_mode<synchronous>, transform_indices = @transform_1, window_bounds = array<i64: 128, 128>}, {pipeline_mode = #tpu.pipeline_mode<synchronous>, transform_indices = @transform_2, window_bounds = array<i64: 1, 128>}, {pipeline_mode = #tpu.pipeline_mode<synchronous>, transform_indices = @transform_3, window_bounds = array<i64: 128, 128>}, {pipeline_mode = #tpu.pipeline_mode<synchronous>, transform_indices = @transform_4, window_bounds = array<i64: 1, 128>}, {transform_indices = @transform_5, window_bounds = array<i64: 16, 128>}]} {
    %c0 = arith.constant 0 : index
    %c0_0 = arith.constant 0 : index
    %0 = vector.load %arg1[%c0, %c0_0] : memref<16x128xf32, #tpu.memory_space<vmem>>, vector<16x128xf32>
    %1 = arith.truncf %0 : vector<16x128xf32> to vector<16x128xbf16>
    %c0_1 = arith.constant 0 : index
    %c0_2 = arith.constant 0 : index
    %2 = vector.load %arg2[%c0_1, %c0_2] : memref<128x128xbf16, #tpu.memory_space<vmem>>, vector<128x128xbf16>
    %cst = arith.constant dense<0.000000e+00> : vector<16x128xf32>
    %3 = tpu.matmul %1, %2, %cst {dimension_numbers = #tpu.dot_dimension_numbers<[1], [0], [0], [1], [0, 0, 1, 1], [], []>} : vector<16x128xbf16>, vector<128x128xbf16>, vector<16x128xf32> -> vector<16x128xf32>
    %c0_3 = arith.constant 0 : index
    %c0_4 = arith.constant 0 : index
    %4 = vector.load %arg3[%c0_3, %c0_4] : memref<1x128xf32, #tpu.memory_space<vmem>>, vector<1x128xf32>
    %5 = vector.broadcast %4 : vector<1x128xf32> to vector<16x128xf32>
    %6 = arith.addf %3, %5 : vector<16x128xf32>
    %cst_5 = arith.constant 5.000000e-01 : f32
    %7 = vector.broadcast %cst_5 : f32 to vector<16x128xf32>
    %8 = arith.mulf %7, %6 : vector<16x128xf32>
    %cst_6 = arith.constant 4.471500e-02 : f32
    %9 = vector.broadcast %cst_6 : f32 to vector<16x128xf32>
    %10 = arith.mulf %9, %6 : vector<16x128xf32>
    %11 = arith.mulf %10, %6 : vector<16x128xf32>
    %12 = arith.mulf %11, %6 : vector<16x128xf32>
    %13 = arith.addf %6, %12 : vector<16x128xf32>
    %cst_7 = arith.constant 0.797884583 : f32
    %14 = vector.broadcast %cst_7 : f32 to vector<16x128xf32>
    %15 = arith.mulf %14, %13 : vector<16x128xf32>
    %16 = math.tanh %15 : vector<16x128xf32>
    %cst_8 = arith.constant 1.000000e+00 : f32
    %17 = vector.broadcast %cst_8 : f32 to vector<16x128xf32>
    %18 = arith.addf %17, %16 : vector<16x128xf32>
    %19 = arith.mulf %8, %18 : vector<16x128xf32>
    %20 = arith.truncf %19 : vector<16x128xf32> to vector<16x128xbf16>
    %c0_9 = arith.constant 0 : index
    %c0_10 = arith.constant 0 : index
    %21 = vector.load %arg4[%c0_9, %c0_10] : memref<128x128xbf16, #tpu.memory_space<vmem>>, vector<128x128xbf16>
    %cst_11 = arith.constant dense<0.000000e+00> : vector<16x128xf32>
    %22 = tpu.matmul %20, %21, %cst_11 {dimension_numbers = #tpu.dot_dimension_numbers<[1], [0], [0], [1], [0, 0, 1, 1], [], []>} : vector<16x128xbf16>, vector<128x128xbf16>, vector<16x128xf32> -> vector<16x128xf32>
    %c0_12 = arith.constant 0 : index
    %c0_13 = arith.constant 0 : index
    %23 = vector.load %arg5[%c0_12, %c0_13] : memref<1x128xf32, #tpu.memory_space<vmem>>, vector<1x128xf32>
    %24 = vector.broadcast %23 : vector<1x128xf32> to vector<16x128xf32>
    %25 = arith.addf %22, %24 : vector<16x128xf32>
    %c0_14 = arith.constant 0 : index
    %c0_15 = arith.constant 0 : index
    %26 = vector.load %arg6[%c0_14, %c0_15] : memref<16x128xf32, #tpu.memory_space<vmem>>, vector<16x128xf32>
    tpu.vector_store %arg6[%c0_14, %c0_15], %25 {strides = array<i32>} : memref<16x128xf32, #tpu.memory_space<vmem>>, vector<16x128xf32>,
    return
  }
  func.func @transform_0(%arg0: i32) -> (i32, i32) {
    %c0_i32 = arith.constant 0 : i32
    %c0_i32_0 = arith.constant 0 : i32
    return %arg0, %c0_i32 : i32, i32
  }
  func.func @transform_1(%arg0: i32) -> (i32, i32) {
    %c0_i32 = arith.constant 0 : i32
    %c0_i32_0 = arith.constant 0 : i32
    %c0_i32_1 = arith.constant 0 : i32
    return %c0_i32, %c0_i32_0 : i32, i32
  }
  func.func @transform_2(%arg0: i32) -> (i32, i32) {
    %c0_i32 = arith.constant 0 : i32
    %c0_i32_0 = arith.constant 0 : i32
    %c0_i32_1 = arith.constant 0 : i32
    return %c0_i32, %c0_i32_0 : i32, i32
  }
  func.func @transform_3(%arg0: i32) -> (i32, i32) {
    %c0_i32 = arith.constant 0 : i32
    %c0_i32_0 = arith.constant 0 : i32
    %c0_i32_1 = arith.constant 0 : i32
    return %c0_i32, %c0_i32_0 : i32, i32
  }
  func.func @transform_4(%arg0: i32) -> (i32, i32) {
    %c0_i32 = arith.constant 0 : i32
    %c0_i32_0 = arith.constant 0 : i32
    %c0_i32_1 = arith.constant 0 : i32
    return %c0_i32, %c0_i32_0 : i32, i32
  }
  func.func @transform_5(%arg0: i32) -> (i32, i32) {
    %c0_i32 = arith.constant 0 : i32
    %c0_i32_0 = arith.constant 0 : i32
    return %arg0, %c0_i32 : i32, i32
  }
}

</mosaic_0001>

<llo_original>
// kernel: tpu_custom_call.1
$region0: #{tpu_custom_call.1}
  #allocation0 [shape = 'u32[]', space=smem, size = 0x4, offset = 0x4, fixed_abs, tag = 'smem constant byte address 0x4 - core index']
  #allocation1 [shape = 'u32[72,128]{1,0:T(1,128)}', space=vmem, size = 0x9000, scoped, tag = 'internal scratch']
  %s0 = inlined_call_operand.hbm [shape: f32[16,128], index: 0, kind: input, shape index: {}]
  %s1 = inlined_call_operand.hbm [shape: bf16[128,128], index: 1, kind: input, shape index: {}]
  %s2 = inlined_call_operand.vmem [shape: f32[1,128], index: 2, kind: input, shape index: {}]
  %s3 = inlined_call_operand.hbm [shape: bf16[128,128], index: 3, kind: input, shape index: {}]
  %s4 = inlined_call_operand.vmem [shape: f32[1,128], index: 4, kind: input, shape index: {}]
  %s5 = inlined_call_operand.hbm [shape: f32[16,128], index: 5, kind: output, shape index: {}]
  %s6 = sld [smem:[#allocation0]]
  $region42: #{tpu_custom_call.1} parent=0
    _
  %s8 = ssub.s32 1, %s6
  %s9 = scalar_select 0, %s8, %s6
  $region1: #{tpu_custom_call.1} parent=0
    #allocation2 [shape = 'u8[8192]{0}', space=vmem, size = 0x2000, scoped, tag = 'input window, operand 0, single buffered']
    #allocation3 [shape = 's32[1]{0}', space=sflag, size = 0x4, scoped, tag = 'scoped memory for tpu_custom_call.1']
    #allocation4 [shape = 's32[1]{0}', space=sflag, size = 0x4, scoped, tag = 'scoped memory for tpu_custom_call.1']
    #allocation5 [shape = 'u8[32768]{0}', space=vmem, size = 0x8000, scoped, tag = 'input window, operand 1, single buffered']
    #allocation6 [shape = 's32[1]{0}', space=sflag, size = 0x4, scoped, tag = 'scoped memory for tpu_custom_call.1']
    #allocation7 [shape = 'u8[32768]{0}', space=vmem, size = 0x8000, scoped, tag = 'input window, operand 3, single buffered']
    #allocation8 [shape = 'u8[8192]{0}', space=vmem, size = 0x2000, scoped, tag = 'output window, operand 0, single buffered']
    %10 = vsyncpa [#allocation3], 0
    %11 = vsyncpa [#allocation6], 0
    %12 = vsyncpa [#allocation4], 0
    // Predicated region
    $region2: #{tpu_custom_call.1} parent=1 // pred_check
      _
    $region3: #{tpu_custom_call.1} parent=1 // pred_check_branch
      %14 = sbr.rel (0) target = $region5
    $region4: #{tpu_custom_call.1} parent=1 // pred_region
      %16 = vsyncadd [#allocation3], 0
      %s17 = sshll.u32 %s0, 4
      %s18 = int_to_ptr.hbm [resolvable:$true] %s17
      %s19 = sshll.u32 [#allocation2], 4
      %s20 = int_to_ptr.vmem [resolvable:$true] %s19
      %25 = dma.hbm_to_vmem [thread:$0]  %s18, 256, %s20, [#allocation3], 128, 128, 8
    $region5: #{tpu_custom_call.1} parent=1 // pred_fallthru
      _
    // Predicated region
    $region6: #{tpu_custom_call.1} parent=1 // pred_check
      _
    $region7: #{tpu_custom_call.1} parent=1 // pred_check_branch
      %27 = sbr.rel (0) target = $region9
    $region8: #{tpu_custom_call.1} parent=1 // pred_region
      %29 = vsyncadd [#allocation6], 0
      %s30 = sshll.u32 %s1, 4
      %s31 = int_to_ptr.hbm [resolvable:$true] %s30
      %s32 = sshll.u32 [#allocation5], 4
      %s33 = int_to_ptr.vmem [resolvable:$true] %s32
      %38 = dma.hbm_to_vmem [thread:$0]  %s31, 1024, %s33, [#allocation6], 64, 64, 4
    $region9: #{tpu_custom_call.1} parent=1 // pred_fallthru
      _
    // Predicated region
    $region10: #{tpu_custom_call.1} parent=1 // pred_check
      _
    $region11: #{tpu_custom_call.1} parent=1 // pred_check_branch
      %40 = sbr.rel (0) target = $region13
    $region12: #{tpu_custom_call.1} parent=1 // pred_region
      _
    $region13: #{tpu_custom_call.1} parent=1 // pred_fallthru
      _
    // Predicated region
    $region14: #{tpu_custom_call.1} parent=1 // pred_check
      _
    $region15: #{tpu_custom_call.1} parent=1 // pred_check_branch
      %42 = sbr.rel (0) target = $region17
    $region16: #{tpu_custom_call.1} parent=1 // pred_region
      %44 = vsyncadd [#allocation6], 0
      %s45 = sshll.u32 %s3, 4
      %s46 = int_to_ptr.hbm [resolvable:$true] %s45
      %s47 = sshll.u32 [#allocation7], 4
      %s48 = int_to_ptr.vmem [resolvable:$true] %s47
      %53 = dma.hbm_to_vmem [thread:$0]  %s46, 1024, %s48, [#allocation6], 64, 64, 4
    $region17: #{tpu_custom_call.1} parent=1 // pred_fallthru
      _
    // Predicated region
    $region18: #{tpu_custom_call.1} parent=1 // pred_check
      _
    $region19: #{tpu_custom_call.1} parent=1 // pred_check_branch
      %55 = sbr.rel (0) target = $region21
    $region20: #{tpu_custom_call.1} parent=1 // pred_region
      _
    $region21: #{tpu_custom_call.1} parent=1 // pred_fallthru
      _
    // Predicated region
    $region22: #{tpu_custom_call.1} parent=1 // pred_check
      _
    $region23: #{tpu_custom_call.1} parent=1 // pred_check_branch
      %57 = sbr.rel (0) target = $region25
    $region24: #{tpu_custom_call.1} parent=1 // pred_region
      %59 = dma.done [#allocation3], 256
    $region25: #{tpu_custom_call.1} parent=1 // pred_fallthru
      _
    // Predicated region
    $region26: #{tpu_custom_call.1} parent=1 // pred_check
      _
    $region27: #{tpu_custom_call.1} parent=1 // pred_check_branch
      %61 = sbr.rel (0) target = $region29
    $region28: #{tpu_custom_call.1} parent=1 // pred_region
      %63 = dma.done [#allocation6], 1024
    $region29: #{tpu_custom_call.1} parent=1 // pred_fallthru
      _
    // Predicated region
    $region30: #{tpu_custom_call.1} parent=1 // pred_check
      _
    $region31: #{tpu_custom_call.1} parent=1 // pred_check_branch
      %65 = sbr.rel (0) target = $region33
    $region32: #{tpu_custom_call.1} parent=1 // pred_region
      %67 = dma.done [#allocation6], 1024
    $region33: #{tpu_custom_call.1} parent=1 // pred_fallthru
      _
    %v68 = vld [vmem:[#allocation2] sm:$0xff]
    %v69 = vld [vmem:[#allocation2 + $0x8] sm:$0xff]
    %v70 = vpack.c.bf16 %v69, %v68
    %v71 = vld [vmem:[#allocation5] sm:$0xf]
    %v72 = vld [vmem:[#allocation5 + $0x4] sm:$0xf]
    %v73 = vld [vmem:[#allocation5 + $0x8] sm:$0xf]
    %v74 = vld [vmem:[#allocation5 + $0xc] sm:$0xf]
    %v75 = vld [vmem:[#allocation5 + $0x10] sm:$0xf]
    %v76 = vld [vmem:[#allocation5 + $0x14] sm:$0xf]
    %v77 = vld [vmem:[#allocation5 + $0x18] sm:$0xf]
    %v78 = vld [vmem:[#allocation5 + $0x1c] sm:$0xf]
    %v79 = vld [vmem:[#allocation5 + $0x20] sm:$0xf]
    %v80 = vld [vmem:[#allocation5 + $0x24] sm:$0xf]
    %v81 = vld [vmem:[#allocation5 + $0x28] sm:$0xf]
    %v82 = vld [vmem:[#allocation5 + $0x2c] sm:$0xf]
    %v83 = vld [vmem:[#allocation5 + $0x30] sm:$0xf]
    %v84 = vld [vmem:[#allocation5 + $0x34] sm:$0xf]
    %v85 = vld [vmem:[#allocation5 + $0x38] sm:$0xf]
    %v86 = vld [vmem:[#allocation5 + $0x3c] sm:$0xf]
    %v87 = vld [vmem:[%s2] sm:$0x1]
    %v89 = vperm.slane %v87, 0
    %v107 = vunpack.c.l.b16 %v71
    %v108 = vunpack.c.l.b16 %v72
    %v109 = vunpack.c.l.b16 %v73
    %v110 = vunpack.c.l.b16 %v74
    %v111 = vunpack.c.l.b16 %v75
    %v112 = vunpack.c.l.b16 %v76
    %v113 = vunpack.c.l.b16 %v77
    %v114 = vunpack.c.l.b16 %v78
    %v115 = vunpack.c.l.b16 %v79
    %v116 = vunpack.c.l.b16 %v80
    %v117 = vunpack.c.l.b16 %v81
    %v118 = vunpack.c.l.b16 %v82
    %v119 = vunpack.c.l.b16 %v83
    %v120 = vunpack.c.l.b16 %v84
    %v121 = vunpack.c.l.b16 %v85
    %v122 = vunpack.c.l.b16 %v86
    %v123 = vpack.c.b16 %v108, %v107
    %v124 = vpack.c.b16 %v110, %v109
    %v125 = vpack.c.b16 %v112, %v111
    %v126 = vpack.c.b16 %v114, %v113
    %v127 = vpack.c.b16 %v116, %v115
    %v128 = vpack.c.b16 %v118, %v117
    %v129 = vpack.c.b16 %v120, %v119
    %v130 = vpack.c.b16 %v122, %v121
    %139 = vmatpush.bf16.msra.mxu0 %v130
    %140 = vmatpush.bf16.msra.mxu0 %v129
    %141 = vmatpush.bf16.msra.mxu0 %v128
    %142 = vmatpush.bf16.msra.mxu0 %v127
    %143 = vmatpush.bf16.msra.mxu0 %v126
    %144 = vmatpush.bf16.msra.mxu0 %v125
    %145 = vmatpush.bf16.msra.mxu0 %v124
    %146 = vmatpush.bf16.msra.mxu0 %v123
    %147 = vmatmul.bf16.gmra.mxu0 %v70
    %v148 = vpop.f32.mrf.mxu0
    %v149 = vadd.f32 %v89, %v148
    %v150 = vpop.f32.mrf.mxu0
    %v151 = vadd.f32 %v89, %v150
    %152 = vdwg.mxu0
    %v153 = vmul.f32 %v149, 0.5
    %v154 = vmul.f32 %v151, 0.5
    %v155 = vmul.f32 %v149, 0.044715
    %v156 = vmul.f32 %v151, 0.044715
    %v157 = vmul.f32 %v155, %v149
    %v158 = vmul.f32 %v156, %v151
    %v159 = vmul.f32 %v157, %v149
    %v160 = vmul.f32 %v158, %v151
    %v161 = vadd.f32 %v149, %v159
    %v162 = vadd.f32 %v151, %v160
    %v163 = vmul.f32 %v161, 0.7978846
    %v164 = vmul.f32 %v162, 0.7978846
    %v165 = vtanh.pop %v163
    %v166 = vtanh.pop %v164
    %v167 = vadd.f32 %v165, 1.0
    %v168 = vadd.f32 %v166, 1.0
    %v169 = vmul.f32 %v153, %v167
    %v170 = vmul.f32 %v154, %v168
    %v171 = vpack.c.bf16 %v170, %v169
    %v172 = vld [vmem:[#allocation7] sm:$0xf]
    %v173 = vld [vmem:[#allocation7 + $0x4] sm:$0xf]
    %v174 = vld [vmem:[#allocation7 + $0x8] sm:$0xf]
    %v175 = vld [vmem:[#allocation7 + $0xc] sm:$0xf]
    %v176 = vld [vmem:[#allocation7 + $0x10] sm:$0xf]
    %v177 = vld [vmem:[#allocation7 + $0x14] sm:$0xf]
    %v178 = vld [vmem:[#allocation7 + $0x18] sm:$0xf]
    %v179 = vld [vmem:[#allocation7 + $0x1c] sm:$0xf]
    %v180 = vld [vmem:[#allocation7 + $0x20] sm:$0xf]
    %v181 = vld [vmem:[#allocation7 + $0x24] sm:$0xf]
    %v182 = vld [vmem:[#allocation7 + $0x28] sm:$0xf]
    %v183 = vld [vmem:[#allocation7 + $0x2c] sm:$0xf]
    %v184 = vld [vmem:[#allocation7 + $0x30] sm:$0xf]
    %v185 = vld [vmem:[#allocation7 + $0x34] sm:$0xf]
    %v186 = vld [vmem:[#allocation7 + $0x38] sm:$0xf]
    %v187 = vld [vmem:[#allocation7 + $0x3c] sm:$0xf]
    %v188 = vld [vmem:[%s4] sm:$0x1]
    %v190 = vperm.slane %v188, 0
    %v208 = vunpack.c.l.b16 %v172
    %v209 = vunpack.c.l.b16 %v173
    %v210 = vunpack.c.l.b16 %v174
    %v211 = vunpack.c.l.b16 %v175
    %v212 = vunpack.c.l.b16 %v176
    %v213 = vunpack.c.l.b16 %v177
    %v214 = vunpack.c.l.b16 %v178
    %v215 = vunpack.c.l.b16 %v179
    %v216 = vunpack.c.l.b16 %v180
    %v217 = vunpack.c.l.b16 %v181
    %v218 = vunpack.c.l.b16 %v182
    %v219 = vunpack.c.l.b16 %v183
    %v220 = vunpack.c.l.b16 %v184
    %v221 = vunpack.c.l.b16 %v185
    %v222 = vunpack.c.l.b16 %v186
    %v223 = vunpack.c.l.b16 %v187
    %v224 = vpack.c.b16 %v209, %v208
    %v225 = vpack.c.b16 %v211, %v210
    %v226 = vpack.c.b16 %v213, %v212
    %v227 = vpack.c.b16 %v215, %v214
    %v228 = vpack.c.b16 %v217, %v216
    %v229 = vpack.c.b16 %v219, %v218
    %v230 = vpack.c.b16 %v221, %v220
    %v231 = vpack.c.b16 %v223, %v222
    %240 = vmatpush.bf16.msra.mxu0 %v231
    %241 = vmatpush.bf16.msra.mxu0 %v230
    %242 = vmatpush.bf16.msra.mxu0 %v229
    %243 = vmatpush.bf16.msra.mxu0 %v228
    %244 = vmatpush.bf16.msra.mxu0 %v227
    %245 = vmatpush.bf16.msra.mxu0 %v226
    %246 = vmatpush.bf16.msra.mxu0 %v225
    %247 = vmatpush.bf16.msra.mxu0 %v224
    %248 = vmatmul.bf16.gmra.mxu0 %v171
    %v249 = vpop.f32.mrf.mxu0
    %v250 = vadd.f32 %v190, %v249
    %v251 = vpop.f32.mrf.mxu0
    %v252 = vadd.f32 %v190, %v251
    %253 = vdwg.mxu0
    %254 = vst [vmem:[#allocation8] sm:$0xff] %v250
    %255 = vst [vmem:[#allocation8 + $0x8] sm:$0xff] %v252
    // Predicated region
    $region34: #{tpu_custom_call.1} parent=1 // pred_check
      _
    $region35: #{tpu_custom_call.1} parent=1 // pred_check_branch
      %257 = sbr.rel (0) target = $region37
    $region36: #{tpu_custom_call.1} parent=1 // pred_region
      %259 = vsyncadd [#allocation4], 0
      %s260 = sshll.u32 [#allocation8], 4
      %s261 = int_to_ptr.vmem [resolvable:$true] %s260
      %s262 = sshll.u32 %s5, 4
      %s263 = int_to_ptr.hbm [resolvable:$true] %s262
      %268 = dma.vmem_to_hbm [thread:$0]  %s261, 256, %s263, [#allocation4], 128, 128, 8
    $region37: #{tpu_custom_call.1} parent=1 // pred_fallthru
      _
    // Predicated region
    $region38: #{tpu_custom_call.1} parent=1 // pred_check
      _
    $region39: #{tpu_custom_call.1} parent=1 // pred_check_branch
      %270 = sbr.rel (0) target = $region41
    $region40: #{tpu_custom_call.1} parent=1 // pred_region
      %272 = dma.done [#allocation4], 256
    $region41: #{tpu_custom_call.1} parent=1 // pred_fallthru
      _
    %273 = vsyncpa [#allocation3], 1
    %274 = vsyncpa [#allocation6], 1
    %275 = vsyncpa [#allocation4], 1

// kernel: tpu_custom_call.1
$region0: #{tpu_custom_call.1}
  #allocation0 [shape = 'u32[]', space=smem, size = 0x4, offset = 0x4, fixed_abs, tag = 'smem constant byte address 0x4 - core index']
  #allocation1 [shape = 'u32[72,128]{1,0:T(1,128)}', space=vmem, size = 0x9000, scoped, tag = 'internal scratch']
  %s0 = inlined_call_operand.hbm [shape: f32[16,128], index: 0, kind: input, shape index: {}]
  %s1 = inlined_call_operand.hbm [shape: bf16[128,128], index: 1, kind: input, shape index: {}]
  %s2 = inlined_call_operand.vmem [shape: f32[1,128], index: 2, kind: input, shape index: {}]
  %s3 = inlined_call_operand.hbm [shape: bf16[128,128], index: 3, kind: input, shape index: {}]
  %s4 = inlined_call_operand.vmem [shape: f32[1,128], index: 4, kind: input, shape index: {}]
  %s5 = inlined_call_operand.hbm [shape: f32[16,128], index: 5, kind: output, shape index: {}]
  %s6 = sld [smem:[#allocation0]]
  $region42: #{tpu_custom_call.1} parent=0
    _
  %s8 = ssub.s32 1, %s6
  %s9 = scalar_select 0, %s8, %s6
  $region1: #{tpu_custom_call.1} parent=0
    #allocation2 [shape = 'u8[8192]{0}', space=vmem, size = 0x2000, scoped, tag = 'input window, operand 0, single buffered']
    #allocation3 [shape = 's32[1]{0}', space=sflag, size = 0x4, scoped, tag = 'scoped memory for tpu_custom_call.1']
    #allocation4 [shape = 's32[1]{0}', space=sflag, size = 0x4, scoped, tag = 'scoped memory for tpu_custom_call.1']
    #allocation5 [shape = 'u8[32768]{0}', space=vmem, size = 0x8000, scoped, tag = 'input window, operand 1, single buffered']
    #allocation6 [shape = 's32[1]{0}', space=sflag, size = 0x4, scoped, tag = 'scoped memory for tpu_custom_call.1']
    #allocation7 [shape = 'u8[32768]{0}', space=vmem, size = 0x8000, scoped, tag = 'input window, operand 3, single buffered']
    #allocation8 [shape = 'u8[8192]{0}', space=vmem, size = 0x2000, scoped, tag = 'output window, operand 0, single buffered']
    %10 = vsyncpa [#allocation3], 0
    %11 = vsyncpa [#allocation6], 0
    %12 = vsyncpa [#allocation4], 0
    // Predicated region
    $region2: #{tpu_custom_call.1} parent=1 // pred_check
      _
    $region3: #{tpu_custom_call.1} parent=1 // pred_check_branch
      %14 = sbr.rel (0) target = $region5
    $region4: #{tpu_custom_call.1} parent=1 // pred_region
      %16 = vsyncadd [#allocation3], 0
      %s17 = sshll.u32 %s0, 4
      %s18 = int_to_ptr.hbm [resolvable:$true] %s17
      %s19 = sshll.u32 [#allocation2], 4
      %s20 = int_to_ptr.vmem [resolvable:$true] %s19
      %25 = dma.hbm_to_vmem [thread:$0]  %s18, 256, %s20, [#allocation3], 128, 128, 8
    $region5: #{tpu_custom_call.1} parent=1 // pred_fallthru
      _
    // Predicated region
    $region6: #{tpu_custom_call.1} parent=1 // pred_check
      _
    $region7: #{tpu_custom_call.1} parent=1 // pred_check_branch
      %27 = sbr.rel (0) target = $region9
    $region8: #{tpu_custom_call.1} parent=1 // pred_region
      %29 = vsyncadd [#allocation6], 0
      %s30 = sshll.u32 %s1, 4
      %s31 = int_to_ptr.hbm [resolvable:$true] %s30
      %s32 = sshll.u32 [#allocation5], 4
      %s33 = int_to_ptr.vmem [resolvable:$true] %s32
      %38 = dma.hbm_to_vmem [thread:$0]  %s31, 1024, %s33, [#allocation6], 64, 64, 4
    $region9: #{tpu_custom_call.1} parent=1 // pred_fallthru
      _
    // Predicated region
    $region10: #{tpu_custom_call.1} parent=1 // pred_check
      _
    $region11: #{tpu_custom_call.1} parent=1 // pred_check_branch
      %40 = sbr.rel (0) target = $region13
    $region12: #{tpu_custom_call.1} parent=1 // pred_region
      _
    $region13: #{tpu_custom_call.1} parent=1 // pred_fallthru
      _
    // Predicated region
    $region14: #{tpu_custom_call.1} parent=1 // pred_check
      _
    $region15: #{tpu_custom_call.1} parent=1 // pred_check_branch
      %42 = sbr.rel (0) target = $region17
    $region16: #{tpu_custom_call.1} parent=1 // pred_region
      %44 = vsyncadd [#allocation6], 0
      %s45 = sshll.u32 %s3, 4
      %s46 = int_to_ptr.hbm [resolvable:$true] %s45
      %s47 = sshll.u32 [#allocation7], 4
      %s48 = int_to_ptr.vmem [resolvable:$true] %s47
      %53 = dma.hbm_to_vmem [thread:$0]  %s46, 1024, %s48, [#allocation6], 64, 64, 4
    $region17: #{tpu_custom_call.1} parent=1 // pred_fallthru
      _
    // Predicated region
    $region18: #{tpu_custom_call.1} parent=1 // pred_check
      _
    $region19: #{tpu_custom_call.1} parent=1 // pred_check_branch
      %55 = sbr.rel (0) target = $region21
    $region20: #{tpu_custom_call.1} parent=1 // pred_region
      _
    $region21: #{tpu_custom_call.1} parent=1 // pred_fallthru
      _
    // Predicated region
    $region22: #{tpu_custom_call.1} parent=1 // pred_check
      _
    $region23: #{tpu_custom_call.1} parent=1 // pred_check_branch
      %57 = sbr.rel (0) target = $region25
    $region24: #{tpu_custom_call.1} parent=1 // pred_region
      %59 = dma.done [#allocation3], 256
    $region25: #{tpu_custom_call.1} parent=1 // pred_fallthru
      _
    // Predicated region
    $region26: #{tpu_custom_call.1} parent=1 // pred_check
      _
    $region27: #{tpu_custom_call.1} parent=1 // pred_check_branch
      %61 = sbr.rel (0) target = $region29
    $region28: #{tpu_custom_call.1} parent=1 // pred_region
      %63 = dma.done [#allocation6], 1024
    $region29: #{tpu_custom_call.1} parent=1 // pred_fallthru
      _
    // Predicated region
    $region30: #{tpu_custom_call.1} parent=1 // pred_check
      _
    $region31: #{tpu_custom_call.1} parent=1 // pred_check_branch
      %65 = sbr.rel (0) target = $region33
    $region32: #{tpu_custom_call.1} parent=1 // pred_region
      %67 = dma.done [#allocation6], 1024
    $region33: #{tpu_custom_call.1} parent=1 // pred_fallthru
      _
    %v68 = vld [vmem:[#allocation2] sm:$0xff]
    %v69 = vld [vmem:[#allocation2 + $0x8] sm:$0xff]
    %v70 = vpack.c.bf16 %v69, %v68
    %v71 = vld [vmem:[#allocation5] sm:$0xf]
    %v72 = vld [vmem:[#allocation5 + $0x4] sm:$0xf]
    %v73 = vld [vmem:[#allocation5 + $0x8] sm:$0xf]
    %v74 = vld [vmem:[#allocation5 + $0xc] sm:$0xf]
    %v75 = vld [vmem:[#allocation5 + $0x10] sm:$0xf]
    %v76 = vld [vmem:[#allocation5 + $0x14] sm:$0xf]
    %v77 = vld [vmem:[#allocation5 + $0x18] sm:$0xf]
    %v78 = vld [vmem:[#allocation5 + $0x1c] sm:$0xf]
    %v79 = vld [vmem:[#allocation5 + $0x20] sm:$0xf]
    %v80 = vld [vmem:[#allocation5 + $0x24] sm:$0xf]
    %v81 = vld [vmem:[#allocation5 + $0x28] sm:$0xf]
    %v82 = vld [vmem:[#allocation5 + $0x2c] sm:$0xf]
    %v83 = vld [vmem:[#allocation5 + $0x30] sm:$0xf]
    %v84 = vld [vmem:[#allocation5 + $0x34] sm:$0xf]
    %v85 = vld [vmem:[#allocation5 + $0x38] sm:$0xf]
    %v86 = vld [vmem:[#allocation5 + $0x3c] sm:$0xf]
    %v87 = vld [vmem:[%s2] sm:$0x1]
    %v89 = vperm.slane %v87, 0
    %v107 = vunpack.c.l.b16 %v71
    %v108 = vunpack.c.l.b16 %v72
    %v109 = vunpack.c.l.b16 %v73
    %v110 = vunpack.c.l.b16 %v74
    %v111 = vunpack.c.l.b16 %v75
    %v112 = vunpack.c.l.b16 %v76
    %v113 = vunpack.c.l.b16 %v77
    %v114 = vunpack.c.l.b16 %v78
    %v115 = vunpack.c.l.b16 %v79
    %v116 = vunpack.c.l.b16 %v80
    %v117 = vunpack.c.l.b16 %v81
    %v118 = vunpack.c.l.b16 %v82
    %v119 = vunpack.c.l.b16 %v83
    %v120 = vunpack.c.l.b16 %v84
    %v121 = vunpack.c.l.b16 %v85
    %v122 = vunpack.c.l.b16 %v86
    %v123 = vpack.c.b16 %v108, %v107
    %v124 = vpack.c.b16 %v110, %v109
    %v125 = vpack.c.b16 %v112, %v111
    %v126 = vpack.c.b16 %v114, %v113
    %v127 = vpack.c.b16 %v116, %v115
    %v128 = vpack.c.b16 %v118, %v117
    %v129 = vpack.c.b16 %v120, %v119
    %v130 = vpack.c.b16 %v122, %v121
    %139 = vmatpush.bf16.msra.mxu0 %v130
    %140 = vmatpush.bf16.msra.mxu0 %v129
    %141 = vmatpush.bf16.msra.mxu0 %v128
    %142 = vmatpush.bf16.msra.mxu0 %v127
    %143 = vmatpush.bf16.msra.mxu0 %v126
    %144 = vmatpush.bf16.msra.mxu0 %v125
    %145 = vmatpush.bf16.msra.mxu0 %v124
    %146 = vmatpush.bf16.msra.mxu0 %v123
    %147 = vmatmul.bf16.gmra.mxu0 %v70
    %v148 = vpop.f32.mrf.mxu0
    %v149 = vadd.f32 %v89, %v148
    %v150 = vpop.f32.mrf.mxu0
    %v151 = vadd.f32 %v89, %v150
    %152 = vdwg.mxu0
    %v153 = vmul.f32 %v149, 0.5
    %v154 = vmul.f32 %v151, 0.5
    %v155 = vmul.f32 %v149, 0.044715
    %v156 = vmul.f32 %v151, 0.044715
    %v157 = vmul.f32 %v155, %v149
    %v158 = vmul.f32 %v156, %v151
    %v159 = vmul.f32 %v157, %v149
    %v160 = vmul.f32 %v158, %v151
    %v161 = vadd.f32 %v149, %v159
    %v162 = vadd.f32 %v151, %v160
    %v163 = vmul.f32 %v161, 0.7978846
    %v164 = vmul.f32 %v162, 0.7978846
    %v165 = vtanh.pop %v163
    %v166 = vtanh.pop %v164
    %v167 = vadd.f32 %v165, 1.0
    %v168 = vadd.f32 %v166, 1.0
    %v169 = vmul.f32 %v153, %v167
    %v170 = vmul.f32 %v154, %v168
    %v171 = vpack.c.bf16 %v170, %v169
    %v172 = vld [vmem:[#allocation7] sm:$0xf]
    %v173 = vld [vmem:[#allocation7 + $0x4] sm:$0xf]
    %v174 = vld [vmem:[#allocation7 + $0x8] sm:$0xf]
    %v175 = vld [vmem:[#allocation7 + $0xc] sm:$0xf]
    %v176 = vld [vmem:[#allocation7 + $0x10] sm:$0xf]
    %v177 = vld [vmem:[#allocation7 + $0x14] sm:$0xf]
    %v178 = vld [vmem:[#allocation7 + $0x18] sm:$0xf]
    %v179 = vld [vmem:[#allocation7 + $0x1c] sm:$0xf]
    %v180 = vld [vmem:[#allocation7 + $0x20] sm:$0xf]
    %v181 = vld [vmem:[#allocation7 + $0x24] sm:$0xf]
    %v182 = vld [vmem:[#allocation7 + $0x28] sm:$0xf]
    %v183 = vld [vmem:[#allocation7 + $0x2c] sm:$0xf]
    %v184 = vld [vmem:[#allocation7 + $0x30] sm:$0xf]
    %v185 = vld [vmem:[#allocation7 + $0x34] sm:$0xf]
    %v186 = vld [vmem:[#allocation7 + $0x38] sm:$0xf]
    %v187 = vld [vmem:[#allocation7 + $0x3c] sm:$0xf]
    %v188 = vld [vmem:[%s4] sm:$0x1]
    %v190 = vperm.slane %v188, 0
    %v208 = vunpack.c.l.b16 %v172
    %v209 = vunpack.c.l.b16 %v173
    %v210 = vunpack.c.l.b16 %v174
    %v211 = vunpack.c.l.b16 %v175
    %v212 = vunpack.c.l.b16 %v176
    %v213 = vunpack.c.l.b16 %v177
    %v214 = vunpack.c.l.b16 %v178
    %v215 = vunpack.c.l.b16 %v179
    %v216 = vunpack.c.l.b16 %v180
    %v217 = vunpack.c.l.b16 %v181
    %v218 = vunpack.c.l.b16 %v182
    %v219 = vunpack.c.l.b16 %v183
    %v220 = vunpack.c.l.b16 %v184
    %v221 = vunpack.c.l.b16 %v185
    %v222 = vunpack.c.l.b16 %v186
    %v223 = vunpack.c.l.b16 %v187
    %v224 = vpack.c.b16 %v209, %v208
    %v225 = vpack.c.b16 %v211, %v210
    %v226 = vpack.c.b16 %v213, %v212
    %v227 = vpack.c.b16 %v215, %v214
    %v228 = vpack.c.b16 %v217, %v216
    %v229 = vpack.c.b16 %v219, %v218
    %v230 = vpack.c.b16 %v221, %v220
    %v231 = vpack.c.b16 %v223, %v222
    %240 = vmatpush.bf16.msra.mxu0 %v231
    %241 = vmatpush.bf16.msra.mxu0 %v230
    %242 = vmatpush.bf16.msra.mxu0 %v229
    %243 = vmatpush.bf16.msra.mxu0 %v228
    %244 = vmatpush.bf16.msra.mxu0 %v227
    %245 = vmatpush.bf16.msra.mxu0 %v226
    %246 = vmatpush.bf16.msra.mxu0 %v225
    %247 = vmatpush.bf16.msra.mxu0 %v224
    %248 = vmatmul.bf16.gmra.mxu0 %v171
    %v249 = vpop.f32.mrf.mxu0
    %v250 = vadd.f32 %v190, %v249
    %v251 = vpop.f32.mrf.mxu0
    %v252 = vadd.f32 %v190, %v251
    %253 = vdwg.mxu0
    %254 = vst [vmem:[#allocation8] sm:$0xff] %v250
    %255 = vst [vmem:[#allocation8 + $0x8] sm:$0xff] %v252
    // Predicated region
    $region34: #{tpu_custom_call.1} parent=1 // pred_check
      _
    $region35: #{tpu_custom_call.1} parent=1 // pred_check_branch
      %257 = sbr.rel (0) target = $region37
    $region36: #{tpu_custom_call.1} parent=1 // pred_region
      %259 = vsyncadd [#allocation4], 0
      %s260 = sshll.u32 [#allocation8], 4
      %s261 = int_to_ptr.vmem [resolvable:$true] %s260
      %s262 = sshll.u32 %s5, 4
      %s263 = int_to_ptr.hbm [resolvable:$true] %s262
      %268 = dma.vmem_to_hbm [thread:$0]  %s261, 256, %s263, [#allocation4], 128, 128, 8
    $region37: #{tpu_custom_call.1} parent=1 // pred_fallthru
      _
    // Predicated region
    $region38: #{tpu_custom_call.1} parent=1 // pred_check
      _
    $region39: #{tpu_custom_call.1} parent=1 // pred_check_branch
      %270 = sbr.rel (0) target = $region41
    $region40: #{tpu_custom_call.1} parent=1 // pred_region
      %272 = dma.done [#allocation4], 256
    $region41: #{tpu_custom_call.1} parent=1 // pred_fallthru
      _
    %273 = vsyncpa [#allocation3], 1
    %274 = vsyncpa [#allocation6], 1
    %275 = vsyncpa [#allocation4], 1

</llo_original>
